<compile_context>
chip_gen: v5e
topology: v5e:2x2
jax: 0.10.0
libtpu: 0.0.40
codegen_flags: <defaults>
</compile_context>

<pallas_src>
import functools
import math

import jax
import jax.numpy as jnp
from jax import lax
from jax.experimental import pallas as pl
from jax.experimental.pallas import tpu as pltpu


def _mha_kernel(x_ref, wqkvT_ref, woT_ref, bqkv_ref, bo_ref,
                o_ref,
                ctx_s,
                *, num_heads: int, head_dim: int, hidden_dim: int):
    # ---- Fused q/k/v projection for this batch's S rows: one MXU matmul.
    x = x_ref[...]                                            # (S, H)
    qkv = jnp.dot(x, wqkvT_ref[...],
                  preferred_element_type=jnp.float32) + bqkv_ref[...]  # (S, 3H)

    inv_sqrt_d = 1.0 / math.sqrt(head_dim)
    # Contract the last dims directly (q @ k^T without materializing k.T).
    qk_dims = (((1,), (1,)), ((), ()))

    # ---- Per-head attention (static loop; num_heads is small & known).
    for h in range(num_heads):
        lo = h * head_dim
        qh = qkv[:, lo:lo + head_dim] * inv_sqrt_d            # (S, d)
        kh = qkv[:, hidden_dim + lo:hidden_dim + lo + head_dim]
        vh = qkv[:, 2 * hidden_dim + lo:2 * hidden_dim + lo + head_dim]

        s = lax.dot_general(qh, kh, qk_dims,
                            preferred_element_type=jnp.float32)   # (S, S)
        s = s - jnp.max(s, axis=-1, keepdims=True)
        p = jnp.exp(s)
        p = p * pl.reciprocal(jnp.sum(p, axis=-1, keepdims=True), approx=True)

        # Write this head's context straight into the (S, H) scratch slab.
        ctx_s[:, lo:lo + head_dim] = jnp.dot(
            p, vh, preferred_element_type=jnp.float32)

    # ---- Output projection for this batch.
    y = jnp.dot(ctx_s[...], woT_ref[...],
                preferred_element_type=jnp.float32) + bo_ref[...]
    o_ref[...] = y.astype(o_ref.dtype)


def multi_head_attention(x, params, *, num_heads: int):
    """x: (B, S, H) float32. params: wq/wk/wv/wo (H,H), bq/bk/bv/bo (H,)."""
    B, S, H = x.shape
    head_dim = H // num_heads

    # Flatten batch*seq for rectangular row-blocking per batch element.
    xf = x.reshape(B * S, H)

    # Trace-time weight prep: y = x @ W.T + b  ->  x @ Wt + b, with q/k/v fused.
    wqkvT = jnp.concatenate(
        [params["wq"].T, params["wk"].T, params["wv"].T], axis=1)   # (H, 3H)
    bqkv = jnp.concatenate(
        [params["bq"], params["bk"], params["bv"]]).reshape(1, 3 * H)
    woT = params["wo"].T                                            # (H, H)
    bo = params["bo"].reshape(1, H)

    kernel = functools.partial(_mha_kernel, num_heads=num_heads,
                               head_dim=head_dim, hidden_dim=H)

    out = pl.pallas_call(
        kernel,
        out_shape=jax.ShapeDtypeStruct((B * S, H), x.dtype),
        grid_spec=pltpu.PrefetchScalarGridSpec(
            num_scalar_prefetch=0,
            grid=(B,),
            in_specs=[
                pl.BlockSpec((S, H), lambda b: (b, 0)),       # x rows of batch b
                pl.BlockSpec((H, 3 * H), lambda b: (0, 0)),   # fused qkv weights
                pl.BlockSpec((H, H), lambda b: (0, 0)),       # out weights
                pl.BlockSpec((1, 3 * H), lambda b: (0, 0)),   # fused qkv bias
                pl.BlockSpec((1, H), lambda b: (0, 0)),       # out bias
            ],
            out_specs=pl.BlockSpec((S, H), lambda b: (b, 0)),
            scratch_shapes=[
                pltpu.VMEM((S, H), jnp.float32),              # per-batch context
            ],
        ),
        # Each grid step is fully independent (no cross-step scratch state),
        # so the batch axis can be split across TensorCores on v7x.
        compiler_params=pltpu.CompilerParams(
            dimension_semantics=("parallel",)),
    )(xf, wqkvT, woT, bqkv, bo)

    return out.reshape(B, S, H)


def _reference(x, params, *, num_heads: int):
    """Pure-JAX reference matching the PyTorch forward (eval mode, mask=None)."""
    B, S, H = x.shape
    d = H // num_heads

    def lin(v, w, b):
        return v @ w.T + b

    q = lin(x, params["wq"], params["bq"]).reshape(B, S, num_heads, d).transpose(0, 2, 1, 3)
    k = lin(x, params["wk"], params["bk"]).reshape(B, S, num_heads, d).transpose(0, 2, 1, 3)
    v = lin(x, params["wv"], params["bv"]).reshape(B, S, num_heads, d).transpose(0, 2, 1, 3)
    scores = jnp.einsum("bhqd,bhkd->bhqk", q, k) / math.sqrt(d)
    attn = jax.nn.softmax(scores, axis=-1)
    out = jnp.einsum("bhqk,bhkd->bhqd", attn, v)
    out = out.transpose(0, 2, 1, 3).reshape(B, S, H)
    return lin(out, params["wo"], params["bo"])


def init_params(key, hidden_dim):
    """Deterministic init mimicking PyTorch nn.Linear default U(-1/sqrt(in), 1/sqrt(in))."""
    bound = 1.0 / math.sqrt(hidden_dim)
    keys = jax.random.split(key, 8)

    def u(k, shape):
        return jax.random.uniform(k, shape, jnp.float32, -bound, bound)

    return {
        "wq": u(keys[0], (hidden_dim, hidden_dim)), "bq": u(keys[1], (hidden_dim,)),
        "wk": u(keys[2], (hidden_dim, hidden_dim)), "bk": u(keys[3], (hidden_dim,)),
        "wv": u(keys[4], (hidden_dim, hidden_dim)), "bv": u(keys[5], (hidden_dim,)),
        "wo": u(keys[6], (hidden_dim, hidden_dim)), "bo": u(keys[7], (hidden_dim,)),
    }


if __name__ == "__main__":
    B, S, H, NUM_HEADS = 2, 8, 32, 4

    key = jax.random.PRNGKey(0)
    kx, kp = jax.random.split(key)
    x = jax.random.normal(kx, (B, S, H), jnp.float32)
    params = init_params(kp, H)

    out = multi_head_attention(x, params, num_heads=NUM_HEADS)
    out = jax.block_until_ready(out)

    ref = _reference(x, params, num_heads=NUM_HEADS)
    assert out.shape == (B, S, H)
    # Tolerance loosened for pl.reciprocal(approx=True) in the softmax denom.
    assert jnp.allclose(out, ref, atol=1e-2, rtol=1e-2), \
        f"max abs err = {jnp.max(jnp.abs(out - ref))}"

    print("KERNEL_OK")
</pallas_src>

<mosaic_0001>
module attributes {stable_mosaic.version = 11 : i64} {
  func.func @_mha_kernel(%arg0: i32, %arg1: memref<8x32xf32, #tpu.memory_space<vmem>>, %arg2: memref<32x96xf32, #tpu.memory_space<vmem>>, %arg3: memref<32x32xf32, #tpu.memory_space<vmem>>, %arg4: memref<1x96xf32, #tpu.memory_space<vmem>>, %arg5: memref<1x32xf32, #tpu.memory_space<vmem>>, %arg6: memref<8x32xf32, #tpu.memory_space<vmem>>, %arg7: memref<8x32xf32, #tpu.memory_space<vmem>>) attributes {dimension_semantics = [#tpu.dimension_semantics<parallel>], iteration_bounds = array<i64: 2>, scalar_prefetch = 0 : i64, scratch_operands = 1 : i64, tpu.core_type = #tpu.core_type<tc>, window_params = [{transform_indices = @transform_0, window_bounds = array<i64: 8, 32>}, {pipeline_mode = #tpu.pipeline_mode<synchronous>, transform_indices = @transform_1, window_bounds = array<i64: 32, 96>}, {pipeline_mode = #tpu.pipeline_mode<synchronous>, transform_indices = @transform_2, window_bounds = array<i64: 32, 32>}, {pipeline_mode = #tpu.pipeline_mode<synchronous>, transform_indices = @transform_3, window_bounds = array<i64: 1, 96>}, {pipeline_mode = #tpu.pipeline_mode<synchronous>, transform_indices = @transform_4, window_bounds = array<i64: 1, 32>}, {transform_indices = @transform_5, window_bounds = array<i64: 8, 32>}]} {
    %c0 = arith.constant 0 : index
    %c0_0 = arith.constant 0 : index
    %0 = vector.load %arg1[%c0, %c0_0] : memref<8x32xf32, #tpu.memory_space<vmem>>, vector<8x32xf32>
    %c0_1 = arith.constant 0 : index
    %c0_2 = arith.constant 0 : index
    %1 = vector.load %arg2[%c0_1, %c0_2] : memref<32x96xf32, #tpu.memory_space<vmem>>, vector<32x96xf32>
    %cst = arith.constant dense<0.000000e+00> : vector<8x96xf32>
    %2 = tpu.matmul %0, %1, %cst {dimension_numbers = #tpu.dot_dimension_numbers<[1], [0], [0], [1], [0, 0, 1, 1], [], []>} : vector<8x32xf32>, vector<32x96xf32>, vector<8x96xf32> -> vector<8x96xf32>
    %c0_3 = arith.constant 0 : index
    %c0_4 = arith.constant 0 : index
    %3 = vector.load %arg4[%c0_3, %c0_4] : memref<1x96xf32, #tpu.memory_space<vmem>>, vector<1x96xf32>
    %4 = vector.broadcast %3 : vector<1x96xf32> to vector<8x96xf32>
    %5 = arith.addf %2, %4 : vector<8x96xf32>
    %6 = vector.extract_strided_slice %5 {offsets = [0, 0], sizes = [8, 8], strides = [1, 1]} : vector<8x96xf32> to vector<8x8xf32>
    %cst_5 = arith.constant 0.353553385 : f32
    %7 = vector.broadcast %cst_5 : f32 to vector<8x8xf32>
    %8 = arith.mulf %6, %7 : vector<8x8xf32>
    %9 = vector.extract_strided_slice %5 {offsets = [0, 32], sizes = [8, 8], strides = [1, 1]} : vector<8x96xf32> to vector<8x8xf32>
    %10 = vector.extract_strided_slice %5 {offsets = [0, 64], sizes = [8, 8], strides = [1, 1]} : vector<8x96xf32> to vector<8x8xf32>
    %cst_6 = arith.constant dense<0.000000e+00> : vector<8x8xf32>
    %11 = tpu.matmul %8, %9, %cst_6 {dimension_numbers = #tpu.dot_dimension_numbers<[1], [1], [0], [0], [0, 0, 1, 0], [], []>} : vector<8x8xf32>, vector<8x8xf32>, vector<8x8xf32> -> vector<8x8xf32>
    %cst_7 = arith.constant dense<0xFF800000> : vector<8xf32>
    %12 = vector.multi_reduction <maximumf>, %11, %cst_7 [1] : vector<8x8xf32> to vector<8xf32>
    %13 = vector.shape_cast %12 : vector<8xf32> to vector<8x1xf32>
    %14 = vector.broadcast %13 : vector<8x1xf32> to vector<8x8xf32>
    %15 = arith.subf %11, %14 : vector<8x8xf32>
    %16 = math.exp %15 : vector<8x8xf32>
    %cst_8 = arith.constant dense<0.000000e+00> : vector<8xf32>
    %17 = vector.multi_reduction <add>, %16, %cst_8 [1] : vector<8x8xf32> to vector<8xf32>
    %18 = vector.shape_cast %17 : vector<8xf32> to vector<8x1xf32>
    %19 = tpu.reciprocal %18 {approx = true} : vector<8x1xf32> -> vector<8x1xf32>
    %20 = vector.broadcast %19 : vector<8x1xf32> to vector<8x8xf32>
    %21 = arith.mulf %16, %20 : vector<8x8xf32>
    %cst_9 = arith.constant dense<0.000000e+00> : vector<8x8xf32>
    %22 = tpu.matmul %21, %10, %cst_9 {dimension_numbers = #tpu.dot_dimension_numbers<[1], [0], [0], [1], [0, 0, 1, 1], [], []>} : vector<8x8xf32>, vector<8x8xf32>, vector<8x8xf32> -> vector<8x8xf32>
    %c0_10 = arith.constant 0 : index
    %c0_11 = arith.constant 0 : index
    %23 = vector.load %arg7[%c0_10, %c0_11] : memref<8x32xf32, #tpu.memory_space<vmem>>, vector<8x8xf32>
    tpu.vector_store %arg7[%c0_10, %c0_11], %22 {strides = array<i32>} : memref<8x32xf32, #tpu.memory_space<vmem>>, vector<8x8xf32>,
    %24 = vector.extract_strided_slice %5 {offsets = [0, 8], sizes = [8, 8], strides = [1, 1]} : vector<8x96xf32> to vector<8x8xf32>
    %cst_12 = arith.constant 0.353553385 : f32
    %25 = vector.broadcast %cst_12 : f32 to vector<8x8xf32>
    %26 = arith.mulf %24, %25 : vector<8x8xf32>
    %27 = vector.extract_strided_slice %5 {offsets = [0, 40], sizes = [8, 8], strides = [1, 1]} : vector<8x96xf32> to vector<8x8xf32>
    %28 = vector.extract_strided_slice %5 {offsets = [0, 72], sizes = [8, 8], strides = [1, 1]} : vector<8x96xf32> to vector<8x8xf32>
    %cst_13 = arith.constant dense<0.000000e+00> : vector<8x8xf32>
    %29 = tpu.matmul %26, %27, %cst_13 {dimension_numbers = #tpu.dot_dimension_numbers<[1], [1], [0], [0], [0, 0, 1, 0], [], []>} : vector<8x8xf32>, vector<8x8xf32>, vector<8x8xf32> -> vector<8x8xf32>
    %cst_14 = arith.constant dense<0xFF800000> : vector<8xf32>
    %30 = vector.multi_reduction <maximumf>, %29, %cst_14 [1] : vector<8x8xf32> to vector<8xf32>
    %31 = vector.shape_cast %30 : vector<8xf32> to vector<8x1xf32>
    %32 = vector.broadcast %31 : vector<8x1xf32> to vector<8x8xf32>
    %33 = arith.subf %29, %32 : vector<8x8xf32>
    %34 = math.exp %33 : vector<8x8xf32>
    %cst_15 = arith.constant dense<0.000000e+00> : vector<8xf32>
    %35 = vector.multi_reduction <add>, %34, %cst_15 [1] : vector<8x8xf32> to vector<8xf32>
    %36 = vector.shape_cast %35 : vector<8xf32> to vector<8x1xf32>
    %37 = tpu.reciprocal %36 {approx = true} : vector<8x1xf32> -> vector<8x1xf32>
    %38 = vector.broadcast %37 : vector<8x1xf32> to vector<8x8xf32>
    %39 = arith.mulf %34, %38 : vector<8x8xf32>
    %cst_16 = arith.constant dense<0.000000e+00> : vector<8x8xf32>
    %40 = tpu.matmul %39, %28, %cst_16 {dimension_numbers = #tpu.dot_dimension_numbers<[1], [0], [0], [1], [0, 0, 1, 1], [], []>} : vector<8x8xf32>, vector<8x8xf32>, vector<8x8xf32> -> vector<8x8xf32>
    %c0_17 = arith.constant 0 : index
    %c8 = arith.constant 8 : index
    %41 = vector.load %arg7[%c0_17, %c8] : memref<8x32xf32, #tpu.memory_space<vmem>>, vector<8x8xf32>
    tpu.vector_store %arg7[%c0_17, %c8], %40 {strides = array<i32>} : memref<8x32xf32, #tpu.memory_space<vmem>>, vector<8x8xf32>,
    %42 = vector.extract_strided_slice %5 {offsets = [0, 16], sizes = [8, 8], strides = [1, 1]} : vector<8x96xf32> to vector<8x8xf32>
    %cst_18 = arith.constant 0.353553385 : f32
    %43 = vector.broadcast %cst_18 : f32 to vector<8x8xf32>
    %44 = arith.mulf %42, %43 : vector<8x8xf32>
    %45 = vector.extract_strided_slice %5 {offsets = [0, 48], sizes = [8, 8], strides = [1, 1]} : vector<8x96xf32> to vector<8x8xf32>
    %46 = vector.extract_strided_slice %5 {offsets = [0, 80], sizes = [8, 8], strides = [1, 1]} : vector<8x96xf32> to vector<8x8xf32>
    %cst_19 = arith.constant dense<0.000000e+00> : vector<8x8xf32>
    %47 = tpu.matmul %44, %45, %cst_19 {dimension_numbers = #tpu.dot_dimension_numbers<[1], [1], [0], [0], [0, 0, 1, 0], [], []>} : vector<8x8xf32>, vector<8x8xf32>, vector<8x8xf32> -> vector<8x8xf32>
    %cst_20 = arith.constant dense<0xFF800000> : vector<8xf32>
    %48 = vector.multi_reduction <maximumf>, %47, %cst_20 [1] : vector<8x8xf32> to vector<8xf32>
    %49 = vector.shape_cast %48 : vector<8xf32> to vector<8x1xf32>
    %50 = vector.broadcast %49 : vector<8x1xf32> to vector<8x8xf32>
    %51 = arith.subf %47, %50 : vector<8x8xf32>
    %52 = math.exp %51 : vector<8x8xf32>
    %cst_21 = arith.constant dense<0.000000e+00> : vector<8xf32>
    %53 = vector.multi_reduction <add>, %52, %cst_21 [1] : vector<8x8xf32> to vector<8xf32>
    %54 = vector.shape_cast %53 : vector<8xf32> to vector<8x1xf32>
    %55 = tpu.reciprocal %54 {approx = true} : vector<8x1xf32> -> vector<8x1xf32>
    %56 = vector.broadcast %55 : vector<8x1xf32> to vector<8x8xf32>
    %57 = arith.mulf %52, %56 : vector<8x8xf32>
    %cst_22 = arith.constant dense<0.000000e+00> : vector<8x8xf32>
    %58 = tpu.matmul %57, %46, %cst_22 {dimension_numbers = #tpu.dot_dimension_numbers<[1], [0], [0], [1], [0, 0, 1, 1], [], []>} : vector<8x8xf32>, vector<8x8xf32>, vector<8x8xf32> -> vector<8x8xf32>
    %c0_23 = arith.constant 0 : index
    %c16 = arith.constant 16 : index
    %59 = vector.load %arg7[%c0_23, %c16] : memref<8x32xf32, #tpu.memory_space<vmem>>, vector<8x8xf32>
    tpu.vector_store %arg7[%c0_23, %c16], %58 {strides = array<i32>} : memref<8x32xf32, #tpu.memory_space<vmem>>, vector<8x8xf32>,
    %60 = vector.extract_strided_slice %5 {offsets = [0, 24], sizes = [8, 8], strides = [1, 1]} : vector<8x96xf32> to vector<8x8xf32>
    %cst_24 = arith.constant 0.353553385 : f32
    %61 = vector.broadcast %cst_24 : f32 to vector<8x8xf32>
    %62 = arith.mulf %60, %61 : vector<8x8xf32>
    %63 = vector.extract_strided_slice %5 {offsets = [0, 56], sizes = [8, 8], strides = [1, 1]} : vector<8x96xf32> to vector<8x8xf32>
    %64 = vector.extract_strided_slice %5 {offsets = [0, 88], sizes = [8, 8], strides = [1, 1]} : vector<8x96xf32> to vector<8x8xf32>
    %cst_25 = arith.constant dense<0.000000e+00> : vector<8x8xf32>
    %65 = tpu.matmul %62, %63, %cst_25 {dimension_numbers = #tpu.dot_dimension_numbers<[1], [1], [0], [0], [0, 0, 1, 0], [], []>} : vector<8x8xf32>, vector<8x8xf32>, vector<8x8xf32> -> vector<8x8xf32>
    %cst_26 = arith.constant dense<0xFF800000> : vector<8xf32>
    %66 = vector.multi_reduction <maximumf>, %65, %cst_26 [1] : vector<8x8xf32> to vector<8xf32>
    %67 = vector.shape_cast %66 : vector<8xf32> to vector<8x1xf32>
    %68 = vector.broadcast %67 : vector<8x1xf32> to vector<8x8xf32>
    %69 = arith.subf %65, %68 : vector<8x8xf32>
    %70 = math.exp %69 : vector<8x8xf32>
    %cst_27 = arith.constant dense<0.000000e+00> : vector<8xf32>
    %71 = vector.multi_reduction <add>, %70, %cst_27 [1] : vector<8x8xf32> to vector<8xf32>
    %72 = vector.shape_cast %71 : vector<8xf32> to vector<8x1xf32>
    %73 = tpu.reciprocal %72 {approx = true} : vector<8x1xf32> -> vector<8x1xf32>
    %74 = vector.broadcast %73 : vector<8x1xf32> to vector<8x8xf32>
    %75 = arith.mulf %70, %74 : vector<8x8xf32>
    %cst_28 = arith.constant dense<0.000000e+00> : vector<8x8xf32>
    %76 = tpu.matmul %75, %64, %cst_28 {dimension_numbers = #tpu.dot_dimension_numbers<[1], [0], [0], [1], [0, 0, 1, 1], [], []>} : vector<8x8xf32>, vector<8x8xf32>, vector<8x8xf32> -> vector<8x8xf32>
    %c0_29 = arith.constant 0 : index
    %c24 = arith.constant 24 : index
    %77 = vector.load %arg7[%c0_29, %c24] : memref<8x32xf32, #tpu.memory_space<vmem>>, vector<8x8xf32>
    tpu.vector_store %arg7[%c0_29, %c24], %76 {strides = array<i32>} : memref<8x32xf32, #tpu.memory_space<vmem>>, vector<8x8xf32>,
    %c0_30 = arith.constant 0 : index
    %c0_31 = arith.constant 0 : index
    %78 = vector.load %arg7[%c0_30, %c0_31] : memref<8x32xf32, #tpu.memory_space<vmem>>, vector<8x32xf32>
    %c0_32 = arith.constant 0 : index
    %c0_33 = arith.constant 0 : index
    %79 = vector.load %arg3[%c0_32, %c0_33] : memref<32x32xf32, #tpu.memory_space<vmem>>, vector<32x32xf32>
    %cst_34 = arith.constant dense<0.000000e+00> : vector<8x32xf32>
    %80 = tpu.matmul %78, %79, %cst_34 {dimension_numbers = #tpu.dot_dimension_numbers<[1], [0], [0], [1], [0, 0, 1, 1], [], []>} : vector<8x32xf32>, vector<32x32xf32>, vector<8x32xf32> -> vector<8x32xf32>
    %c0_35 = arith.constant 0 : index
    %c0_36 = arith.constant 0 : index
    %81 = vector.load %arg5[%c0_35, %c0_36] : memref<1x32xf32, #tpu.memory_space<vmem>>, vector<1x32xf32>
    %82 = vector.broadcast %81 : vector<1x32xf32> to vector<8x32xf32>
    %83 = arith.addf %80, %82 : vector<8x32xf32>
    %c0_37 = arith.constant 0 : index
    %c0_38 = arith.constant 0 : index
    %84 = vector.load %arg6[%c0_37, %c0_38] : memref<8x32xf32, #tpu.memory_space<vmem>>, vector<8x32xf32>
    tpu.vector_store %arg6[%c0_37, %c0_38], %83 {strides = array<i32>} : memref<8x32xf32, #tpu.memory_space<vmem>>, vector<8x32xf32>,
    return
  }
  func.func @transform_0(%arg0: i32) -> (i32, i32) {
    %c0_i32 = arith.constant 0 : i32
    %c0_i32_0 = arith.constant 0 : i32
    return %arg0, %c0_i32 : i32, i32
  }
  func.func @transform_1(%arg0: i32) -> (i32, i32) {
    %c0_i32 = arith.constant 0 : i32
    %c0_i32_0 = arith.constant 0 : i32
    %c0_i32_1 = arith.constant 0 : i32
    return %c0_i32, %c0_i32_0 : i32, i32
  }
  func.func @transform_2(%arg0: i32) -> (i32, i32) {
    %c0_i32 = arith.constant 0 : i32
    %c0_i32_0 = arith.constant 0 : i32
    %c0_i32_1 = arith.constant 0 : i32
    return %c0_i32, %c0_i32_0 : i32, i32
  }
  func.func @transform_3(%arg0: i32) -> (i32, i32) {
    %c0_i32 = arith.constant 0 : i32
    %c0_i32_0 = arith.constant 0 : i32
    %c0_i32_1 = arith.constant 0 : i32
    return %c0_i32, %c0_i32_0 : i32, i32
  }
  func.func @transform_4(%arg0: i32) -> (i32, i32) {
    %c0_i32 = arith.constant 0 : i32
    %c0_i32_0 = arith.constant 0 : i32
    %c0_i32_1 = arith.constant 0 : i32
    return %c0_i32, %c0_i32_0 : i32, i32
  }
  func.func @transform_5(%arg0: i32) -> (i32, i32) {
    %c0_i32 = arith.constant 0 : i32
    %c0_i32_0 = arith.constant 0 : i32
    return %arg0, %c0_i32 : i32, i32
  }
}

</mosaic_0001>

<llo_original>
// kernel: tpu_custom_call.1
$region0: #{tpu_custom_call.1}
  #allocation0 [shape = 'u32[]', space=smem, size = 0x4, offset = 0x4, fixed_abs, tag = 'smem constant byte address 0x4 - core index']
  #allocation1 [shape = 'u32[72,128]{1,0:T(1,128)}', space=vmem, size = 0x9000, scoped, tag = 'internal scratch']
  #allocation2 [shape = 'f32[8,32]{1,0:T(8,128)}', space=vmem, size = 0x1000, scoped, tag = 'scratch operand']
  %s0 = inlined_call_operand.hbm [shape: f32[16,32], index: 0, kind: input, shape index: {}]
  %s1 = inlined_call_operand.hbm [shape: f32[32,96], index: 1, kind: input, shape index: {}]
  %s2 = inlined_call_operand.hbm [shape: f32[32,32], index: 2, kind: input, shape index: {}]
  %s3 = inlined_call_operand.vmem [shape: f32[1,96], index: 3, kind: input, shape index: {}]
  %s4 = inlined_call_operand.vmem [shape: f32[1,32], index: 4, kind: input, shape index: {}]
  %s5 = inlined_call_operand.hbm [shape: f32[16,32], index: 5, kind: output, shape index: {}]
  %s6 = sld [smem:[#allocation0]]
  $region65: #{tpu_custom_call.1} parent=0
    _
  %s8 = ssub.s32 1, %s6
  %s9 = scalar_select 0, %s8, %s6
  $region1: #{tpu_custom_call.1} parent=0
    #allocation3 [shape = 'u8[8192]{0}', space=vmem, size = 0x2000, scoped, tag = 'input window, operand 0']
    #allocation4 [shape = 's32[2]{0}', space=sflag, size = 0x8, scoped, tag = 'scoped memory for tpu_custom_call.1']
    #allocation5 [shape = 's32[2]{0}', space=sflag, size = 0x8, scoped, tag = 'scoped memory for tpu_custom_call.1']
    #allocation6 [shape = 'u8[16384]{0}', space=vmem, size = 0x4000, scoped, tag = 'input window, operand 1, single buffered']
    #allocation7 [shape = 's32[1]{0}', space=sflag, size = 0x4, scoped, tag = 'scoped memory for tpu_custom_call.1']
    #allocation8 [shape = 'u8[16384]{0}', space=vmem, size = 0x4000, scoped, tag = 'input window, operand 2, single buffered']
    #allocation9 [shape = 'u8[8192]{0}', space=vmem, size = 0x2000, scoped, tag = 'output window, operand 0']
    %10 = vsyncpa [#allocation4], 0
    %s11 = scalar_lea.sflag [#allocation4], 1
    %12 = vsyncpa %s11, 0
    %13 = vsyncpa [#allocation7], 0
    %14 = vsyncpa [#allocation5], 0
    %s15 = scalar_lea.sflag [#allocation5], 1
    %16 = vsyncpa %s15, 0
    loop: start=0, step=1, limit=4
    $region2: #{tpu_custom_call.1} parent=1 // loop_pre_header
      _
    $region3: #{tpu_custom_call.1} parent=1 // loop_header
      %s18 = sphi 0, %s22
      %p19 = scmp.ge.s32.totalorder %s18, 4
      %s28 = sphi 0, %s30
      %s31 = sphi 0, %s28
      %s32 = sphi 0, %s31
      %s48 = sphi 0, %s32
      %s52 = sphi 0, %s52
      %s54 = sphi 0, %s52
      %s55 = sphi 0, %s54
      %s69 = sphi 0, %s55
      %s73 = sphi 0, %s73
      %s75 = sphi 0, %s73
      %s76 = sphi 0, %s75
      %s90 = sphi 0, %s76
      %s94 = sphi 0, %s94
      %s96 = sphi 0, %s94
      %s97 = sphi 0, %s96
      %s111 = sphi 0, %s97
      %s115 = sphi 0, %s115
      %s117 = sphi 0, %s115
      %s118 = sphi 0, %s117
      %s132 = sphi 0, %s118
      %s138 = sphi 0, %s140
      %s141 = sphi 0, %s138
      %s142 = sphi 0, %s141
      %s158 = sphi 0, %s142
    $region4: #{tpu_custom_call.1} parent=1 // loop_header_branch
      %21 = sbr.rel (%p19) target = $region8
    $region5: #{tpu_custom_call.1} parent=1 // loop_body
      %s23 = ssub.s32 %s18, 1
      %s24 = ssub.s32 %s18, 2
      %s25 = sadd.s32 %s18, 1
      %s26 = ssub.s32 %s18, %s25
      %p27 = scmp.eq.s32.totalorder %s26, 0
      %s29 = sadd.s32 %s28, 1
      %s30 = scalar_select %p27, %s28, %s29
      %p33 = pneg %p27
      %p34 = scmp.eq.s32.totalorder %s18, 1
      %p35 = por %p33, %p34
      %p36 = scmp.ne.s32.totalorder %s28, %s31
      %p37 = scmp.eq.s32.totalorder %s18, 0
      %p38 = por %p36, %p37
      %p39 = scmp.ne.s32.totalorder %s28, %s31
      %p40 = scmp.eq.s32.totalorder %s23, 1
      %p41 = por %p39, %p40
      %p42 = scmp.ne.s32.totalorder %s31, %s32
      %p43 = scmp.eq.s32.totalorder %s23, 0
      %p44 = por %p42, %p43
      %p45 = scmp.ne.s32.totalorder %s31, %s32
      %p46 = scmp.eq.s32.totalorder %s24, 1
      %p47 = por %p45, %p46
      %p49 = scmp.ne.s32.totalorder %s32, %s48
      %p50 = scmp.eq.s32.totalorder %s24, 0
      %p51 = por %p49, %p50
      %s53 = sadd.s32 %s52, 1
      %p56 = scmp.eq.s32.totalorder %s18, 1
      %p57 = scmp.ne.s32.totalorder %s52, %s54
      %p58 = scmp.eq.s32.totalorder %s18, 0
      %p59 = por %p57, %p58
      %p60 = scmp.ne.s32.totalorder %s52, %s54
      %p61 = scmp.eq.s32.totalorder %s23, 1
      %p62 = por %p60, %p61
      %p63 = scmp.ne.s32.totalorder %s54, %s55
      %p64 = scmp.eq.s32.totalorder %s23, 0
      %p65 = por %p63, %p64
      %p66 = scmp.ne.s32.totalorder %s54, %s55
      %p67 = scmp.eq.s32.totalorder %s24, 1
      %p68 = por %p66, %p67
      %p70 = scmp.ne.s32.totalorder %s55, %s69
      %p71 = scmp.eq.s32.totalorder %s24, 0
      %p72 = por %p70, %p71
      %s74 = sadd.s32 %s73, 1
      %p77 = scmp.eq.s32.totalorder %s18, 1
      %p78 = scmp.ne.s32.totalorder %s73, %s75
      %p79 = scmp.eq.s32.totalorder %s18, 0
      %p80 = por %p78, %p79
      %p81 = scmp.ne.s32.totalorder %s73, %s75
      %p82 = scmp.eq.s32.totalorder %s23, 1
      %p83 = por %p81, %p82
      %p84 = scmp.ne.s32.totalorder %s75, %s76
      %p85 = scmp.eq.s32.totalorder %s23, 0
      %p86 = por %p84, %p85
      %p87 = scmp.ne.s32.totalorder %s75, %s76
      %p88 = scmp.eq.s32.totalorder %s24, 1
      %p89 = por %p87, %p88
      %p91 = scmp.ne.s32.totalorder %s76, %s90
      %p92 = scmp.eq.s32.totalorder %s24, 0
      %p93 = por %p91, %p92
      %s95 = sadd.s32 %s94, 1
      %p98 = scmp.eq.s32.totalorder %s18, 1
      %p99 = scmp.ne.s32.totalorder %s94, %s96
      %p100 = scmp.eq.s32.totalorder %s18, 0
      %p101 = por %p99, %p100
      %p102 = scmp.ne.s32.totalorder %s94, %s96
      %p103 = scmp.eq.s32.totalorder %s23, 1
      %p104 = por %p102, %p103
      %p105 = scmp.ne.s32.totalorder %s96, %s97
      %p106 = scmp.eq.s32.totalorder %s23, 0
      %p107 = por %p105, %p106
      %p108 = scmp.ne.s32.totalorder %s96, %s97
      %p109 = scmp.eq.s32.totalorder %s24, 1
      %p110 = por %p108, %p109
      %p112 = scmp.ne.s32.totalorder %s97, %s111
      %p113 = scmp.eq.s32.totalorder %s24, 0
      %p114 = por %p112, %p113
      %s116 = sadd.s32 %s115, 1
      %p119 = scmp.eq.s32.totalorder %s18, 1
      %p120 = scmp.ne.s32.totalorder %s115, %s117
      %p121 = scmp.eq.s32.totalorder %s18, 0
      %p122 = por %p120, %p121
      %p123 = scmp.ne.s32.totalorder %s115, %s117
      %p124 = scmp.eq.s32.totalorder %s23, 1
      %p125 = por %p123, %p124
      %p126 = scmp.ne.s32.totalorder %s117, %s118
      %p127 = scmp.eq.s32.totalorder %s23, 0
      %p128 = por %p126, %p127
      %p129 = scmp.ne.s32.totalorder %s117, %s118
      %p130 = scmp.eq.s32.totalorder %s24, 1
      %p131 = por %p129, %p130
      %p133 = scmp.ne.s32.totalorder %s118, %s132
      %p134 = scmp.eq.s32.totalorder %s24, 0
      %p135 = por %p133, %p134
      %s136 = ssub.s32 %s18, %s25
      %p137 = scmp.eq.s32.totalorder %s136, 0
      %s139 = sadd.s32 %s138, 1
      %s140 = scalar_select %p137, %s138, %s139
      %p143 = pneg %p137
      %p144 = scmp.eq.s32.totalorder %s18, 1
      %p145 = por %p143, %p144
      %p146 = scmp.ne.s32.totalorder %s138, %s141
      %p147 = scmp.eq.s32.totalorder %s18, 0
      %p148 = por %p146, %p147
      %p149 = scmp.ne.s32.totalorder %s138, %s141
      %p150 = scmp.eq.s32.totalorder %s23, 1
      %p151 = por %p149, %p150
      %p152 = scmp.ne.s32.totalorder %s141, %s142
      %p153 = scmp.eq.s32.totalorder %s23, 0
      %p154 = por %p152, %p153
      %p155 = scmp.ne.s32.totalorder %s141, %s142
      %p156 = scmp.eq.s32.totalorder %s24, 1
      %p157 = por %p155, %p156
      %p159 = scmp.ne.s32.totalorder %s142, %s158
      %p160 = scmp.eq.s32.totalorder %s24, 0
      %p161 = por %p159, %p160
      %p162 = scmp.le.s32.totalorder 1, %s18
      %p163 = scmp.lt.s32.totalorder %s18, 3
      %p164 = pnand %p162, %p163
      %p165 = pneg %p164
      // Predicated region
      $region9: #{tpu_custom_call.1} parent=5 // pred_check
        _
      $region10: #{tpu_custom_call.1} parent=5 // pred_check_branch
        %167 = sbr.rel (%p164) target = $region12
      $region11: #{tpu_custom_call.1} parent=5 // pred_region
        %s168 = ssub.s32 %s18, 1
        // Predicated region
        $region13: #{tpu_custom_call.1} parent=11 // pred_check
          %p169 = pneg %p65
        $region14: #{tpu_custom_call.1} parent=11 // pred_check_branch
          %171 = sbr.rel (%p169) target = $region16
        $region15: #{tpu_custom_call.1} parent=11 // pred_region
          %173 = vsyncadd [#allocation7], 0
          %s174 = sshll.u32 %s1, 4
          %s175 = int_to_ptr.hbm [resolvable:$true] %s174
          %s176 = sshll.u32 [#allocation6], 4
          %s177 = int_to_ptr.vmem [resolvable:$true] %s176
          %182 = dma.hbm_to_vmem [thread:$0]  %s175, 512, %s177, [#allocation7], 128, 128, 8
        $region16: #{tpu_custom_call.1} parent=11 // pred_fallthru
          _
        // Predicated region
        $region17: #{tpu_custom_call.1} parent=11 // pred_check
          %p183 = pneg %p86
        $region18: #{tpu_custom_call.1} parent=11 // pred_check_branch
          %185 = sbr.rel (%p183) target = $region20
        $region19: #{tpu_custom_call.1} parent=11 // pred_region
          %187 = vsyncadd [#allocation7], 0
          %s188 = sshll.u32 %s2, 4
          %s189 = int_to_ptr.hbm [resolvable:$true] %s188
          %s190 = sshll.u32 [#allocation8], 4
          %s191 = int_to_ptr.vmem [resolvable:$true] %s190
          %196 = dma.hbm_to_vmem [thread:$0]  %s189, 512, %s191, [#allocation7], 128, 128, 8
        $region20: #{tpu_custom_call.1} parent=11 // pred_fallthru
          _
        // Predicated region
        $region21: #{tpu_custom_call.1} parent=11 // pred_check
          %p197 = pneg %p107
        $region22: #{tpu_custom_call.1} parent=11 // pred_check_branch
          %199 = sbr.rel (%p197) target = $region24
        $region23: #{tpu_custom_call.1} parent=11 // pred_region
          _
        $region24: #{tpu_custom_call.1} parent=11 // pred_fallthru
          _
        // Predicated region
        $region25: #{tpu_custom_call.1} parent=11 // pred_check
          %p200 = pneg %p128
        $region26: #{tpu_custom_call.1} parent=11 // pred_check_branch
          %202 = sbr.rel (%p200) target = $region28
        $region27: #{tpu_custom_call.1} parent=11 // pred_region
          _
        $region28: #{tpu_custom_call.1} parent=11 // pred_fallthru
          _
      $region12: #{tpu_custom_call.1} parent=5 // pred_fallthru
        _
      %p203 = scmp.lt.s32.totalorder %s18, 2
      // Predicated region
      $region29: #{tpu_custom_call.1} parent=5 // pred_check
        %p204 = pneg %p203
      $region30: #{tpu_custom_call.1} parent=5 // pred_check_branch
        %206 = sbr.rel (%p204) target = $region32
      $region31: #{tpu_custom_call.1} parent=5 // pred_region
        // Predicated region
        $region33: #{tpu_custom_call.1} parent=31 // pred_check
          %p207 = pneg %p38
        $region34: #{tpu_custom_call.1} parent=31 // pred_check_branch
          %209 = sbr.rel (%p207) target = $region36
        $region35: #{tpu_custom_call.1} parent=31 // pred_region
          %s210 = sand.u32 %s28, 1
          %s211 = scalar_lea.sflag [#allocation4], %s210
          %s212 = sand.u32 %s28, 1
          %s213 = smul.addr %s212, 8
          %s214 = scalar_lea.vmem [#allocation3], %s213
          %216 = vsyncadd %s211, 0
          %s217 = smul.addr %s18, 8
          %s218 = scalar_lea.hbm %s0, %s217
          %s220 = sshll.u32 %s218, 4
          %s221 = int_to_ptr.hbm [resolvable:$true] %s220
          %s222 = sshll.u32 %s214, 4
          %s223 = int_to_ptr.vmem [resolvable:$true] %s222
          %225 = dma.hbm_to_vmem [thread:$0]  %s221, 128, %s223, %s211
        $region36: #{tpu_custom_call.1} parent=31 // pred_fallthru
          _
      $region32: #{tpu_custom_call.1} parent=5 // pred_fallthru
        _
      %p226 = scmp.le.s32.totalorder 1, %s18
      %p227 = scmp.lt.s32.totalorder %s18, 3
      %p228 = pnand %p226, %p227
      %p229 = pneg %p228
      // Predicated region
      $region37: #{tpu_custom_call.1} parent=5 // pred_check
        _
      $region38: #{tpu_custom_call.1} parent=5 // pred_check_branch
        %231 = sbr.rel (%p228) target = $region40
      $region39: #{tpu_custom_call.1} parent=5 // pred_region
        %s232 = ssub.s32 %s18, 1
        %s233 = sand.u32 %s31, 1
        %s234 = scalar_lea.sflag [#allocation4], %s233
        %s235 = sand.u32 %s31, 1
        %s236 = smul.addr %s235, 8
        %s237 = scalar_lea.vmem [#allocation3], %s236
        // Predicated region
        $region41: #{tpu_custom_call.1} parent=39 // pred_check
          %p238 = pneg %p44
        $region42: #{tpu_custom_call.1} parent=39 // pred_check_branch
          %240 = sbr.rel (%p238) target = $region44
        $region43: #{tpu_custom_call.1} parent=39 // pred_region
          %242 = dma.done %s234, 128
        $region44: #{tpu_custom_call.1} parent=39 // pred_fallthru
          _
        // Predicated region
        $region45: #{tpu_custom_call.1} parent=39 // pred_check
          %p243 = pneg %p65
        $region46: #{tpu_custom_call.1} parent=39 // pred_check_branch
          %245 = sbr.rel (%p243) target = $region48
        $region47: #{tpu_custom_call.1} parent=39 // pred_region
          %247 = dma.done [#allocation7], 512
        $region48: #{tpu_custom_call.1} parent=39 // pred_fallthru
          _
        // Predicated region
        $region49: #{tpu_custom_call.1} parent=39 // pred_check
          %p248 = pneg %p86
        $region50: #{tpu_custom_call.1} parent=39 // pred_check_branch
          %250 = sbr.rel (%p248) target = $region52
        $region51: #{tpu_custom_call.1} parent=39 // pred_region
          %252 = dma.done [#allocation7], 512
        $region52: #{tpu_custom_call.1} parent=39 // pred_fallthru
          _
        %s253 = sand.u32 %s31, 1
        %s254 = scalar_lea.sflag [#allocation4], %s253
        %s255 = sand.u32 %s31, 1
        %s256 = smul.addr %s255, 8
        %s257 = scalar_lea.vmem [#allocation3], %s256
        %p258 = pneg %p44
        %p259 = pneg %p41
        %p260 = pneg %p65
        %p261 = pneg %p62
        %p262 = pneg %p86
        %p263 = pneg %p83
        %p264 = pneg %p107
        %p265 = pneg %p104
        %p266 = pneg %p128
        %p267 = pneg %p125
        %p268 = pneg %p154
        %p269 = pneg %p151
        %s270 = sand.u32 %s141, 1
        %s271 = scalar_lea.sflag [#allocation5], %s270
        %s272 = sand.u32 %s141, 1
        %s273 = smul.addr %s272, 8
        %s274 = scalar_lea.vmem [#allocation9], %s273
        %v275 = vld [vmem:[%s237] sm:$0xff]
        %v276 = vld [vmem:[#allocation6] sm:$0xff]
        %v277 = vld [vmem:[#allocation6 + $0x8] sm:$0xff]
        %v278 = vld [vmem:[#allocation6 + $0x10] sm:$0xff]
        %v279 = vld [vmem:[#allocation6 + $0x18] sm:$0xff]
        %v280 = vld [vmem:[%s3] sm:$0x1]
        %v282 = vperm.slane %v280, 0
        %vm284 = vcmask 261120
        %v286 = vsel %vm284, %v275, 0
        %288 = vmatpush.msra.mxu0 0.0
        %289 = vmatpush.msra.mxu0 0.0
        %290 = vmatpush.msra.mxu0 0.0
        %291 = vmatpush.msra.mxu0 0.0
        %292 = vmatpush.msra.mxu0 0.0
        %293 = vmatpush.msra.mxu0 0.0
        %294 = vmatpush.msra.mxu0 0.0
        %295 = vmatpush.msra.mxu0 0.0
        %296 = vmatpush.msra.mxu0 0.0
        %297 = vmatpush.msra.mxu0 0.0
        %298 = vmatpush.msra.mxu0 0.0
        %299 = vmatpush.msra.mxu0 0.0
        %300 = vmatpush.msra.mxu0 %v279
        %301 = vmatpush.msra.mxu0 %v278
        %302 = vmatpush.msra.mxu0 %v277
        %303 = vmatpush.msra.mxu0 %v276
        %304 = vmatmul.f32.gmra.mxu0 %v286
        %v305 = vpop.f32.mrf.mxu0
        %v306 = vadd.f32 %v282, %v305
        %307 = vdwg.mxu0
        %v308 = vmul.f32 %v306, 0.35355338
        %310 = vrot.lane.b32.xlu0 %v306, 96
        %v311 = vpop.permute.xlu0 %310
        %vm312 = vcmask 64512
        %v314 = vsel %vm312, %v308, 0
        %v316 = vsel %vm312, %v311, 0
        %318 = vmatpush.xpose.msra.mxu0 0.0
        %319 = vmatpush.xpose.msra.mxu0 0.0
        %320 = vmatpush.xpose.msra.mxu0 0.0
        %321 = vmatpush.xpose.msra.mxu0 0.0
        %322 = vmatpush.xpose.msra.mxu0 0.0
        %323 = vmatpush.xpose.msra.mxu0 0.0
        %324 = vmatpush.xpose.msra.mxu0 0.0
        %325 = vmatpush.xpose.msra.mxu0 0.0
        %326 = vmatpush.xpose.msra.mxu0 0.0
        %327 = vmatpush.xpose.msra.mxu0 0.0
        %328 = vmatpush.xpose.msra.mxu0 0.0
        %329 = vmatpush.xpose.msra.mxu0 0.0
        %330 = vmatpush.xpose.msra.mxu0 0.0
        %331 = vmatpush.xpose.msra.mxu0 0.0
        %332 = vmatpush.xpose.msra.mxu0 0.0
        %333 = vmatpush.xpose.msra.mxu0 %v316
        %334 = vmatmul.f32.gmra.mxu0 %v314
        %v335 = vpop.f32.mrf.mxu0
        %v336 = vadd.f32 0.0, %v335
        %337 = vdwg.mxu0
        %v338 = vsel %vm312, %v336, -inf
        %339 = vmax.xlane.f32.xlu0 %v338
        %v340 = vpop.xlane.xlu0 %339
        %v341 = vsub.f32 %v336, %v340
        %v342 = vmul.f32 %v341, 1.442695
        %v343 = vpow.pop %v342
        %v344 = vsel %vm312, %v343, 0.0
        %345 = vadd.xlane.f32.xlu0 %v344
        %v346 = vpop.xlane.xlu0 %345
        %v347 = vrcp.pop %v346
        %v348 = vmul.f32 %v343, %v347
        %349 = vrot.lane.b32.xlu0 %v306, 64
        %v350 = vpop.permute.xlu0 %349
        %v353 = vsel %vm312, %v348, 0
        %355 = vmatpush.msra.mxu0 0.0
        %356 = vmatpush.msra.mxu0 0.0
        %357 = vmatpush.msra.mxu0 0.0
        %358 = vmatpush.msra.mxu0 0.0
        %359 = vmatpush.msra.mxu0 0.0
        %360 = vmatpush.msra.mxu0 0.0
        %361 = vmatpush.msra.mxu0 0.0
        %362 = vmatpush.msra.mxu0 0.0
        %363 = vmatpush.msra.mxu0 0.0
        %364 = vmatpush.msra.mxu0 0.0
        %365 = vmatpush.msra.mxu0 0.0
        %366 = vmatpush.msra.mxu0 0.0
        %367 = vmatpush.msra.mxu0 0.0
        %368 = vmatpush.msra.mxu0 0.0
        %369 = vmatpush.msra.mxu0 0.0
        %370 = vmatpush.msra.mxu0 %v350
        %371 = vmatmul.f32.gmra.mxu0 %v353
        %v372 = vpop.f32.mrf.mxu0
        %v373 = vadd.f32 0.0, %v372
        %374 = vdwg.mxu0
        %375 = vst.msk [vmem:[#allocation2] sm:$0xff] %vm312, %v373
        %376 = vrot.lane.b32.xlu0 %v308, 120
        %v377 = vpop.permute.xlu0 %376
        %378 = vrot.lane.b32.xlu0 %v306, 88
        %v379 = vpop.permute.xlu0 %378
        %v380 = vsel %vm312, %v377, 0
        %v382 = vsel %vm312, %v379, 0
        %384 = vmatpush.xpose.msra.mxu0 0.0
        %385 = vmatpush.xpose.msra.mxu0 0.0
        %386 = vmatpush.xpose.msra.mxu0 0.0
        %387 = vmatpush.xpose.msra.mxu0 0.0
        %388 = vmatpush.xpose.msra.mxu0 0.0
        %389 = vmatpush.xpose.msra.mxu0 0.0
        %390 = vmatpush.xpose.msra.mxu0 0.0
        %391 = vmatpush.xpose.msra.mxu0 0.0
        %392 = vmatpush.xpose.msra.mxu0 0.0
        %393 = vmatpush.xpose.msra.mxu0 0.0
        %394 = vmatpush.xpose.msra.mxu0 0.0
        %395 = vmatpush.xpose.msra.mxu0 0.0
        %396 = vmatpush.xpose.msra.mxu0 0.0
        %397 = vmatpush.xpose.msra.mxu0 0.0
        %398 = vmatpush.xpose.msra.mxu0 0.0
        %399 = vmatpush.xpose.msra.mxu0 %v382
        %400 = vmatmul.f32.gmra.mxu0 %v380
        %v401 = vpop.f32.mrf.mxu0
        %v402 = vadd.f32 0.0, %v401
        %403 = vdwg.mxu0
        %v404 = vsel %vm312, %v402, -inf
        %405 = vmax.xlane.f32.xlu0 %v404
        %v406 = vpop.xlane.xlu0 %405
        %v407 = vsub.f32 %v402, %v406
        %v408 = vmul.f32 %v407, 1.442695
        %v409 = vpow.pop %v408
        %v410 = vsel %vm312, %v409, 0.0
        %411 = vadd.xlane.f32.xlu0 %v410
        %v412 = vpop.xlane.xlu0 %411
        %v413 = vrcp.pop %v412
        %v414 = vmul.f32 %v409, %v413
        %415 = vrot.lane.b32.xlu0 %v306, 56
        %v416 = vpop.permute.xlu0 %415
        %v419 = vsel %vm312, %v414, 0
        %421 = vmatpush.msra.mxu0 0.0
        %422 = vmatpush.msra.mxu0 0.0
        %423 = vmatpush.msra.mxu0 0.0
        %424 = vmatpush.msra.mxu0 0.0
        %425 = vmatpush.msra.mxu0 0.0
        %426 = vmatpush.msra.mxu0 0.0
        %427 = vmatpush.msra.mxu0 0.0
        %428 = vmatpush.msra.mxu0 0.0
        %429 = vmatpush.msra.mxu0 0.0
        %430 = vmatpush.msra.mxu0 0.0
        %431 = vmatpush.msra.mxu0 0.0
        %432 = vmatpush.msra.mxu0 0.0
        %433 = vmatpush.msra.mxu0 0.0
        %434 = vmatpush.msra.mxu0 0.0
        %435 = vmatpush.msra.mxu0 0.0
        %436 = vmatpush.msra.mxu0 %v416
        %437 = vmatmul.f32.gmra.mxu0 %v419
        %v438 = vpop.f32.mrf.mxu0
        %v439 = vadd.f32 0.0, %v438
        %440 = vdwg.mxu0
        %442 = vrot.lane.b32.xlu0 %v439, 8
        %v443 = vpop.permute.xlu0 %442
        %vm445 = vcmask 130112
        %446 = vst.msk [vmem:[#allocation2] sm:$0xff] %vm445, %v443
        %447 = vrot.lane.b32.xlu0 %v308, 112
        %v448 = vpop.permute.xlu0 %447
        %449 = vrot.lane.b32.xlu0 %v306, 80
        %v450 = vpop.permute.xlu0 %449
        %v451 = vsel %vm312, %v448, 0
        %v453 = vsel %vm312, %v450, 0
        %455 = vmatpush.xpose.msra.mxu0 0.0
        %456 = vmatpush.xpose.msra.mxu0 0.0
        %457 = vmatpush.xpose.msra.mxu0 0.0
        %458 = vmatpush.xpose.msra.mxu0 0.0
        %459 = vmatpush.xpose.msra.mxu0 0.0
        %460 = vmatpush.xpose.msra.mxu0 0.0
        %461 = vmatpush.xpose.msra.mxu0 0.0
        %462 = vmatpush.xpose.msra.mxu0 0.0
        %463 = vmatpush.xpose.msra.mxu0 0.0
        %464 = vmatpush.xpose.msra.mxu0 0.0
        %465 = vmatpush.xpose.msra.mxu0 0.0
        %466 = vmatpush.xpose.msra.mxu0 0.0
        %467 = vmatpush.xpose.msra.mxu0 0.0
        %468 = vmatpush.xpose.msra.mxu0 0.0
        %469 = vmatpush.xpose.msra.mxu0 0.0
        %470 = vmatpush.xpose.msra.mxu0 %v453
        %471 = vmatmul.f32.gmra.mxu0 %v451
        %v472 = vpop.f32.mrf.mxu0
        %v473 = vadd.f32 0.0, %v472
        %474 = vdwg.mxu0
        %v475 = vsel %vm312, %v473, -inf
        %476 = vmax.xlane.f32.xlu0 %v475
        %v477 = vpop.xlane.xlu0 %476
        %v478 = vsub.f32 %v473, %v477
        %v479 = vmul.f32 %v478, 1.442695
        %v480 = vpow.pop %v479
        %v481 = vsel %vm312, %v480, 0.0
        %482 = vadd.xlane.f32.xlu0 %v481
        %v483 = vpop.xlane.xlu0 %482
        %v484 = vrcp.pop %v483
        %v485 = vmul.f32 %v480, %v484
        %486 = vrot.lane.b32.xlu0 %v306, 48
        %v487 = vpop.permute.xlu0 %486
        %v490 = vsel %vm312, %v485, 0
        %492 = vmatpush.msra.mxu0 0.0
        %493 = vmatpush.msra.mxu0 0.0
        %494 = vmatpush.msra.mxu0 0.0
        %495 = vmatpush.msra.mxu0 0.0
        %496 = vmatpush.msra.mxu0 0.0
        %497 = vmatpush.msra.mxu0 0.0
        %498 = vmatpush.msra.mxu0 0.0
        %499 = vmatpush.msra.mxu0 0.0
        %500 = vmatpush.msra.mxu0 0.0
        %501 = vmatpush.msra.mxu0 0.0
        %502 = vmatpush.msra.mxu0 0.0
        %503 = vmatpush.msra.mxu0 0.0
        %504 = vmatpush.msra.mxu0 0.0
        %505 = vmatpush.msra.mxu0 0.0
        %506 = vmatpush.msra.mxu0 0.0
        %507 = vmatpush.msra.mxu0 %v487
        %508 = vmatmul.f32.gmra.mxu0 %v490
        %v509 = vpop.f32.mrf.mxu0
        %v510 = vadd.f32 0.0, %v509
        %511 = vdwg.mxu0
        %513 = vrot.lane.b32.xlu0 %v510, 16
        %v514 = vpop.permute.xlu0 %513
        %vm516 = vcmask 195712
        %517 = vst.msk [vmem:[#allocation2] sm:$0xff] %vm516, %v514
        %518 = vrot.lane.b32.xlu0 %v308, 104
        %v519 = vpop.permute.xlu0 %518
        %520 = vrot.lane.b32.xlu0 %v306, 72
        %v521 = vpop.permute.xlu0 %520
        %v522 = vsel %vm312, %v519, 0
        %v524 = vsel %vm312, %v521, 0
        %526 = vmatpush.xpose.msra.mxu0 0.0
        %527 = vmatpush.xpose.msra.mxu0 0.0
        %528 = vmatpush.xpose.msra.mxu0 0.0
        %529 = vmatpush.xpose.msra.mxu0 0.0
        %530 = vmatpush.xpose.msra.mxu0 0.0
        %531 = vmatpush.xpose.msra.mxu0 0.0
        %532 = vmatpush.xpose.msra.mxu0 0.0
        %533 = vmatpush.xpose.msra.mxu0 0.0
        %534 = vmatpush.xpose.msra.mxu0 0.0
        %535 = vmatpush.xpose.msra.mxu0 0.0
        %536 = vmatpush.xpose.msra.mxu0 0.0
        %537 = vmatpush.xpose.msra.mxu0 0.0
        %538 = vmatpush.xpose.msra.mxu0 0.0
        %539 = vmatpush.xpose.msra.mxu0 0.0
        %540 = vmatpush.xpose.msra.mxu0 0.0
        %541 = vmatpush.xpose.msra.mxu0 %v524
        %542 = vmatmul.f32.gmra.mxu0 %v522
        %v543 = vpop.f32.mrf.mxu0
        %v544 = vadd.f32 0.0, %v543
        %545 = vdwg.mxu0
        %v546 = vsel %vm312, %v544, -inf
        %547 = vmax.xlane.f32.xlu0 %v546
        %v548 = vpop.xlane.xlu0 %547
        %v549 = vsub.f32 %v544, %v548
        %v550 = vmul.f32 %v549, 1.442695
        %v551 = vpow.pop %v550
        %v552 = vsel %vm312, %v551, 0.0
        %553 = vadd.xlane.f32.xlu0 %v552
        %v554 = vpop.xlane.xlu0 %553
        %v555 = vrcp.pop %v554
        %v556 = vmul.f32 %v551, %v555
        %557 = vrot.lane.b32.xlu0 %v306, 40
        %v558 = vpop.permute.xlu0 %557
        %v561 = vsel %vm312, %v556, 0
        %563 = vmatpush.msra.mxu0 0.0
        %564 = vmatpush.msra.mxu0 0.0
        %565 = vmatpush.msra.mxu0 0.0
        %566 = vmatpush.msra.mxu0 0.0
        %567 = vmatpush.msra.mxu0 0.0
        %568 = vmatpush.msra.mxu0 0.0
        %569 = vmatpush.msra.mxu0 0.0
        %570 = vmatpush.msra.mxu0 0.0
        %571 = vmatpush.msra.mxu0 0.0
        %572 = vmatpush.msra.mxu0 0.0
        %573 = vmatpush.msra.mxu0 0.0
        %574 = vmatpush.msra.mxu0 0.0
        %575 = vmatpush.msra.mxu0 0.0
        %576 = vmatpush.msra.mxu0 0.0
        %577 = vmatpush.msra.mxu0 0.0
        %578 = vmatpush.msra.mxu0 %v558
        %579 = vmatmul.f32.gmra.mxu0 %v561
        %v580 = vpop.f32.mrf.mxu0
        %v581 = vadd.f32 0.0, %v580
        %582 = vdwg.mxu0
        %584 = vrot.lane.b32.xlu0 %v581, 24
        %v585 = vpop.permute.xlu0 %584
        %vm587 = vcmask 261312
        %588 = vst.msk [vmem:[#allocation2] sm:$0xff] %vm587, %v585
        %v589 = vld [vmem:[#allocation2] sm:$0xff]
        %v590 = vld [vmem:[#allocation8] sm:$0xff]
        %v591 = vld [vmem:[#allocation8 + $0x8] sm:$0xff]
        %v592 = vld [vmem:[#allocation8 + $0x10] sm:$0xff]
        %v593 = vld [vmem:[#allocation8 + $0x18] sm:$0xff]
        %v594 = vld [vmem:[%s4] sm:$0x1]
        %v596 = vperm.slane %v594, 0
        %v599 = vsel %vm284, %v589, 0
        %601 = vmatpush.msra.mxu0 0.0
        %602 = vmatpush.msra.mxu0 0.0
        %603 = vmatpush.msra.mxu0 0.0
        %604 = vmatpush.msra.mxu0 0.0
        %605 = vmatpush.msra.mxu0 0.0
        %606 = vmatpush.msra.mxu0 0.0
        %607 = vmatpush.msra.mxu0 0.0
        %608 = vmatpush.msra.mxu0 0.0
        %609 = vmatpush.msra.mxu0 0.0
        %610 = vmatpush.msra.mxu0 0.0
        %611 = vmatpush.msra.mxu0 0.0
        %612 = vmatpush.msra.mxu0 0.0
        %613 = vmatpush.msra.mxu0 %v593
        %614 = vmatpush.msra.mxu0 %v592
        %615 = vmatpush.msra.mxu0 %v591
        %616 = vmatpush.msra.mxu0 %v590
        %617 = vmatmul.f32.gmra.mxu0 %v599
        %v618 = vpop.f32.mrf.mxu0
        %v619 = vadd.f32 %v596, %v618
        %620 = vdwg.mxu0
        %621 = vst.msk [vmem:[%s274] sm:$0xff] %vm284, %v619
        %s622 = sand.u32 %s141, 1
        %s623 = scalar_lea.sflag [#allocation5], %s622
        %s624 = sand.u32 %s141, 1
        %s625 = smul.addr %s624, 8
        %s626 = scalar_lea.vmem [#allocation9], %s625
        // Predicated region
        $region53: #{tpu_custom_call.1} parent=39 // pred_check
          %p627 = pneg %p151
        $region54: #{tpu_custom_call.1} parent=39 // pred_check_branch
          %629 = sbr.rel (%p627) target = $region56
        $region55: #{tpu_custom_call.1} parent=39 // pred_region
          %631 = vsyncadd %s623, 0
          %s632 = smul.addr %s23, 8
          %s633 = scalar_lea.hbm %s5, %s632
          %s635 = sshll.u32 %s626, 4
          %s636 = int_to_ptr.vmem [resolvable:$true] %s635
          %s637 = sshll.u32 %s633, 4
          %s638 = int_to_ptr.hbm [resolvable:$true] %s637
          %640 = dma.vmem_to_hbm [thread:$0]  %s636, 128, %s638, %s623
        $region56: #{tpu_custom_call.1} parent=39 // pred_fallthru
          _
      $region40: #{tpu_custom_call.1} parent=5 // pred_fallthru
        _
      %p641 = scmp.le.s32.totalorder 2, %s18
      // Predicated region
      $region57: #{tpu_custom_call.1} parent=5 // pred_check
        %p642 = pneg %p641
      $region58: #{tpu_custom_call.1} parent=5 // pred_check_branch
        %644 = sbr.rel (%p642) target = $region60
      $region59: #{tpu_custom_call.1} parent=5 // pred_region
        %s645 = ssub.s32 %s18, 2
        // Predicated region
        $region61: #{tpu_custom_call.1} parent=59 // pred_check
          %p646 = pneg %p157
        $region62: #{tpu_custom_call.1} parent=59 // pred_check_branch
          %648 = sbr.rel (%p646) target = $region64
        $region63: #{tpu_custom_call.1} parent=59 // pred_region
          %s649 = sand.u32 %s142, 1
          %s650 = scalar_lea.sflag [#allocation5], %s649
          %s651 = sand.u32 %s142, 1
          %s652 = smul.addr %s651, 8
          %s653 = scalar_lea.vmem [#allocation9], %s652
          %655 = dma.done %s650, 128
        $region64: #{tpu_custom_call.1} parent=59 // pred_fallthru
          _
      $region60: #{tpu_custom_call.1} parent=5 // pred_fallthru
        _
    $region6: #{tpu_custom_call.1} parent=1 // loop_footer
      %s22 = sadd.s32 1, %s18
    $region7: #{tpu_custom_call.1} parent=1 // loop_footer_branch
      %17 = sbr.rel target = $region3
    $region8: #{tpu_custom_call.1} parent=1 // loop_exit
      _
    %656 = vsyncpa [#allocation4], 1
    %s657 = scalar_lea.sflag [#allocation4], 1
    %658 = vsyncpa %s657, 1
    %659 = vsyncpa [#allocation7], 1
    %660 = vsyncpa [#allocation5], 1
    %s661 = scalar_lea.sflag [#allocation5], 1
    %662 = vsyncpa %s661, 1

</llo_original>
